<compile_context>
chip_gen: v5e
topology: v5e:2x2
jax: 0.10.0
libtpu: 0.0.40
codegen_flags: <defaults>
</compile_context>

<pallas_src>
import math
import functools

import jax
import jax.numpy as jnp
from jax import lax
from jax.experimental import pallas as pl
from jax.experimental.pallas import tpu as pltpu


# ----------------------- Pass 1: wide Q / KV projections -----------------------
def _qkv_proj_kernel(q_ref, kv_ref, wq_ref, bq_ref, wkv_ref, bkv_ref,
                     qp_ref, kp_ref, vp_ref):
    D = wq_ref.shape[1]
    q = q_ref[0]                                                   # (TN, C) bf16
    kv = kv_ref[0]                                                 # (TN, C) bf16
    # Wide matmuls on the MXU: f32 accumulation, f32 biases.
    qp = jnp.dot(q, wq_ref[...], preferred_element_type=jnp.float32) + bq_ref[...]
    kvp = jnp.dot(kv, wkv_ref[...], preferred_element_type=jnp.float32) + bkv_ref[...]
    qp_ref[0] = qp.astype(qp_ref.dtype)                            # (TN, D) bf16
    kvp_bf = kvp.astype(kp_ref.dtype)                              # (TN, 2D) bf16
    kp_ref[0] = kvp_bf[:, :D]                                      # 128-aligned lane split
    vp_ref[0] = kvp_bf[:, D:]


# ------------------- Pass 2: flash attention (online softmax) -------------------
def _flash_attn_kernel(q_ref, k_ref, v_ref, ctx_ref, *, block_kv):
    H, TQ, d = q_ref.shape[1], q_ref.shape[2], q_ref.shape[3]
    N = k_ref.shape[2]
    num_kv = N // block_kv

    qh = q_ref[0]                                                  # (H, TQ, d) bf16, scale folded

    def body(ki, carry):
        m, l, acc = carry
        start = pl.multiple_of(ki * block_kv, block_kv)
        kh = k_ref[0, :, pl.ds(start, block_kv), :]                # (H, TKV, d) bf16
        vh = v_ref[0, :, pl.ds(start, block_kv), :]
        s = jnp.einsum('hqd,hkd->hqk', qh, kh,
                       preferred_element_type=jnp.float32)         # (H, TQ, TKV) f32
        m_new = jnp.maximum(m, s.max(axis=-1, keepdims=True))
        # Keep only one full-size f32 score tensor live: s dies once p is formed.
        p = jnp.exp(s - m_new)
        alpha = jnp.exp(m - m_new)
        l_new = alpha * l + p.sum(axis=-1, keepdims=True)
        acc_new = alpha * acc + jnp.einsum('hqk,hkd->hqd', p.astype(jnp.bfloat16), vh,
                                           preferred_element_type=jnp.float32)
        return m_new, l_new, acc_new

    m0 = jnp.full((H, TQ, 1), -jnp.inf, dtype=jnp.float32)
    l0 = jnp.zeros((H, TQ, 1), dtype=jnp.float32)
    acc0 = jnp.zeros((H, TQ, d), dtype=jnp.float32)
    m, l, acc = lax.fori_loop(0, num_kv, body, (m0, l0, acc0),
                              unroll=True if num_kv <= 8 else False)

    inv_l = pl.reciprocal(l, approx=True)                          # EUP slot
    ctx_ref[0] = (acc * inv_l).astype(ctx_ref.dtype)               # (H, TQ, d) bf16


# ----------------------- Pass 3: wide output projection -----------------------
def _out_proj_kernel(x_ref, wo_ref, bo_ref, o_ref):
    out = jnp.dot(x_ref[0], wo_ref[...],
                  preferred_element_type=jnp.float32) + bo_ref[...]
    o_ref[0] = out.astype(o_ref.dtype)                             # (TN, C), lane-dense


def crossmha_forward(q, kv, params, *, num_heads, qkv_dim,
                     block_q=128, block_kv=128, block_n=128,
                     vmem_limit_bytes=None):
    """q, kv: (B, N, C) float32. Returns (B, N, C) float32."""
    assert q.shape == kv.shape
    B, N, C = q.shape
    H, d = num_heads, qkv_dim
    D = H * d
    wq, bq, wkv, bkv, wo, bo = params
    assert wq.shape == (C, D) and wkv.shape == (C, 2 * D) and wo.shape == (D, C)

    block_q = min(block_q, N)
    block_kv = min(block_kv, N)
    block_n = min(block_n, N)
    assert N % block_q == 0 and N % block_kv == 0 and N % block_n == 0, \
        "N must divide by the block sizes"

    # Resident projected K/V (one batch, double-buffered, lane-padded) must fit VMEM.
    lane_d = ((d + 127) // 128) * 128
    kv_resident = 2 * 2 * H * N * lane_d * 2          # 2 arrays x 2 buffers x bf16
    if kv_resident > 48 * 1024 * 1024:
        raise ValueError("projected K/V for one batch does not fit VMEM; "
                         "reduce N or add a kv-tile grid axis")

    if vmem_limit_bytes is None:
        q_buf = H * block_q * lane_d * 2
        score = H * block_q * block_kv * 4
        acc = H * block_q * lane_d * 4
        est = kv_resident + 2 * 2 * q_buf + 3 * score + 2 * acc
        vmem_limit_bytes = int(min(112 * 1024 * 1024,
                                   max(est + 8 * 1024 * 1024, 24 * 1024 * 1024)))

    scale = 1.0 / math.sqrt(d)   # PyTorch SDPA default scale = 1/sqrt(head_dim)

    # Fold the scale into the Q projection in f32, then cast weights to bf16 (MXU).
    wq_bf = (wq * scale).astype(jnp.bfloat16)
    bq2 = (bq * scale).reshape(1, D).astype(jnp.float32)
    wkv_bf = wkv.astype(jnp.bfloat16)
    bkv2 = bkv.reshape(1, 2 * D).astype(jnp.float32)
    wo_bf = wo.astype(jnp.bfloat16)
    bo2 = bo.reshape(1, C).astype(jnp.float32)

    q_bf = q.astype(jnp.bfloat16)
    kv_bf = kv.astype(jnp.bfloat16)

    # ---- Pass 1: project Q/K/V once per token tile (hoisted out of the q-tile loop) ----
    qp, kp, vp = pl.pallas_call(
        _qkv_proj_kernel,
        out_shape=(jax.ShapeDtypeStruct((B, N, D), jnp.bfloat16),
                   jax.ShapeDtypeStruct((B, N, D), jnp.bfloat16),
                   jax.ShapeDtypeStruct((B, N, D), jnp.bfloat16)),
        grid_spec=pltpu.PrefetchScalarGridSpec(
            num_scalar_prefetch=0,
            grid=(B, N // block_n),
            in_specs=[
                pl.BlockSpec((1, block_n, C), lambda b, ni: (b, ni, 0)),   # q
                pl.BlockSpec((1, block_n, C), lambda b, ni: (b, ni, 0)),   # kv
                pl.BlockSpec((C, D), lambda b, ni: (0, 0)),                # Wq (scaled)
                pl.BlockSpec((1, D), lambda b, ni: (0, 0)),                # bq (scaled)
                pl.BlockSpec((C, 2 * D), lambda b, ni: (0, 0)),            # Wkv
                pl.BlockSpec((1, 2 * D), lambda b, ni: (0, 0)),            # bkv
            ],
            out_specs=[
                pl.BlockSpec((1, block_n, D), lambda b, ni: (b, ni, 0)),
                pl.BlockSpec((1, block_n, D), lambda b, ni: (b, ni, 0)),
                pl.BlockSpec((1, block_n, D), lambda b, ni: (b, ni, 0)),
            ]),
        compiler_params=pltpu.CompilerParams(
            dimension_semantics=("parallel", "parallel")),
    )(q_bf, kv_bf, wq_bf, bq2, wkv_bf, bkv2)

    # Head split as cheap XLA layout plumbing: (B, N, D) -> (B, H, N, d).
    def to_heads(t):
        return t.reshape(B, N, H, d).transpose(0, 2, 1, 3)

    qh, kh, vh = to_heads(qp), to_heads(kp), to_heads(vp)

    # ---- Pass 2: flash attention; projected K/V resident in VMEM across q tiles ----
    ctx = pl.pallas_call(
        functools.partial(_flash_attn_kernel, block_kv=block_kv),
        out_shape=jax.ShapeDtypeStruct((B, H, N, d), jnp.bfloat16),
        grid_spec=pltpu.PrefetchScalarGridSpec(
            num_scalar_prefetch=0,
            grid=(B, N // block_q),
            in_specs=[
                pl.BlockSpec((1, H, block_q, d), lambda b, qi: (b, 0, qi, 0)),  # Qh tile
                pl.BlockSpec((1, H, N, d), lambda b, qi: (b, 0, 0, 0)),         # Kh (resident)
                pl.BlockSpec((1, H, N, d), lambda b, qi: (b, 0, 0, 0)),         # Vh (resident)
            ],
            out_specs=pl.BlockSpec((1, H, block_q, d), lambda b, qi: (b, 0, qi, 0))),
        compiler_params=pltpu.CompilerParams(
            dimension_semantics=("parallel", "parallel"),
            vmem_limit_bytes=vmem_limit_bytes),
    )(qh, kh, vh)

    # Merge heads back (layout plumbing): (B, H, N, d) -> (B, N, D).
    ctx2 = ctx.transpose(0, 2, 1, 3).reshape(B, N, D)

    # ---- Pass 3: wide output projection (TN, D) @ (D, C), lane-dense store ----
    out = pl.pallas_call(
        _out_proj_kernel,
        out_shape=jax.ShapeDtypeStruct((B, N, C), q.dtype),
        grid_spec=pltpu.PrefetchScalarGridSpec(
            num_scalar_prefetch=0,
            grid=(B, N // block_n),
            in_specs=[
                pl.BlockSpec((1, block_n, D), lambda b, ni: (b, ni, 0)),   # ctx
                pl.BlockSpec((D, C), lambda b, ni: (0, 0)),                # Wo
                pl.BlockSpec((1, C), lambda b, ni: (0, 0)),                # bo
            ],
            out_specs=pl.BlockSpec((1, block_n, C), lambda b, ni: (b, ni, 0))),
        compiler_params=pltpu.CompilerParams(
            dimension_semantics=("parallel", "parallel")),
    )(ctx2, wo_bf, bo2)
    return out


def _init_linear(key, fan_in, fan_out):
    # PyTorch nn.Linear default init: U(-1/sqrt(fan_in), 1/sqrt(fan_in)) for W and b.
    kw, kb = jax.random.split(key)
    bound = 1.0 / math.sqrt(fan_in)
    w = jax.random.uniform(kw, (fan_in, fan_out), jnp.float32, -bound, bound)  # (in, out)
    b = jax.random.uniform(kb, (fan_out,), jnp.float32, -bound, bound)
    return w, b


def _reference_forward(q, kv, params, *, num_heads, qkv_dim):
    """Pure-JAX f32 reference of CrossMHA.forward for validation."""
    wq, bq, wkv, bkv, wo, bo = params
    B, N, C = q.shape
    D = num_heads * qkv_dim
    qp = q @ wq + bq
    kvp = kv @ wkv + bkv
    k, v = kvp[..., :D], kvp[..., D:]

    def split_heads(t):
        return t.reshape(B, N, num_heads, qkv_dim).transpose(0, 2, 1, 3)  # (B,H,N,d)

    qh, kh, vh = split_heads(qp), split_heads(k), split_heads(v)
    s = jnp.einsum("bhnd,bhmd->bhnm", qh, kh) / math.sqrt(qkv_dim)
    p = jax.nn.softmax(s, axis=-1)
    x = jnp.einsum("bhnm,bhmd->bhnd", p, vh)
    x = x.transpose(0, 2, 1, 3).reshape(B, N, D)
    return x @ wo + bo


if __name__ == "__main__":
    # Small shapes consistent with the module.  C = D = 128 keeps all projection /
    # output stores lane-dense, and N = 128 respects the 128 block-size floor
    # (the review flagged 32-wide demo tiles as below the MXU efficiency point).
    B, N, embed_dim = 2, 128, 128
    num_heads = 4
    qkv_dim = embed_dim // num_heads     # qkv_dim=None path in __init__
    D = num_heads * qkv_dim

    key = jax.random.PRNGKey(0)
    kq, kkv, kparam_q, kparam_kv, kparam_o = jax.random.split(key, 5)

    q = jax.random.normal(kq, (B, N, embed_dim), jnp.float32)
    kv = jax.random.normal(kkv, (B, N, embed_dim), jnp.float32)

    wq, bq = _init_linear(kparam_q, embed_dim, D)
    wkv, bkv = _init_linear(kparam_kv, embed_dim, 2 * D)
    wo, bo = _init_linear(kparam_o, D, embed_dim)
    params = (wq, bq, wkv, bkv, wo, bo)

    out = crossmha_forward(q, kv, params, num_heads=num_heads, qkv_dim=qkv_dim,
                           block_q=128, block_kv=128, block_n=128)
    out = jax.block_until_ready(out)

    ref = _reference_forward(q, kv, params, num_heads=num_heads, qkv_dim=qkv_dim)
    assert out.shape == (B, N, embed_dim)
    # bf16 MXU operands (f32 accumulation) -> compare against f32 reference loosely.
    assert jnp.allclose(out, ref, atol=3e-2, rtol=3e-2), "mismatch vs reference"

    print("KERNEL_OK")
</pallas_src>

<mosaic_0001>
module attributes {stable_mosaic.version = 11 : i64} {
  func.func @_qkv_proj_kernel(%arg0: i32, %arg1: i32, %arg2: memref<1x128x128xbf16, #tpu.memory_space<vmem>>, %arg3: memref<1x128x128xbf16, #tpu.memory_space<vmem>>, %arg4: memref<128x128xbf16, #tpu.memory_space<vmem>>, %arg5: memref<1x128xf32, #tpu.memory_space<vmem>>, %arg6: memref<128x256xbf16, #tpu.memory_space<vmem>>, %arg7: memref<1x256xf32, #tpu.memory_space<vmem>>, %arg8: memref<1x128x128xbf16, #tpu.memory_space<vmem>>, %arg9: memref<1x128x128xbf16, #tpu.memory_space<vmem>>, %arg10: memref<1x128x128xbf16, #tpu.memory_space<vmem>>) attributes {dimension_semantics = [#tpu.dimension_semantics<parallel>, #tpu.dimension_semantics<parallel>], iteration_bounds = array<i64: 2, 1>, scalar_prefetch = 0 : i64, scratch_operands = 0 : i64, tpu.core_type = #tpu.core_type<tc>, window_params = [{transform_indices = @transform_0, window_bounds = array<i64: 1, 128, 128>}, {transform_indices = @transform_1, window_bounds = array<i64: 1, 128, 128>}, {pipeline_mode = #tpu.pipeline_mode<synchronous>, transform_indices = @transform_2, window_bounds = array<i64: 128, 128>}, {pipeline_mode = #tpu.pipeline_mode<synchronous>, transform_indices = @transform_3, window_bounds = array<i64: 1, 128>}, {pipeline_mode = #tpu.pipeline_mode<synchronous>, transform_indices = @transform_4, window_bounds = array<i64: 128, 256>}, {pipeline_mode = #tpu.pipeline_mode<synchronous>, transform_indices = @transform_5, window_bounds = array<i64: 1, 256>}, {transform_indices = @transform_6, window_bounds = array<i64: 1, 128, 128>}, {transform_indices = @transform_7, window_bounds = array<i64: 1, 128, 128>}, {transform_indices = @transform_8, window_bounds = array<i64: 1, 128, 128>}]} {
    %c0 = arith.constant 0 : index
    %c0_0 = arith.constant 0 : index
    %c0_1 = arith.constant 0 : index
    %0 = vector.load %arg2[%c0, %c0_0, %c0_1] : memref<1x128x128xbf16, #tpu.memory_space<vmem>>, vector<1x128x128xbf16>
    %1 = vector.shape_cast %0 : vector<1x128x128xbf16> to vector<128x128xbf16>
    %c0_2 = arith.constant 0 : index
    %c0_3 = arith.constant 0 : index
    %c0_4 = arith.constant 0 : index
    %2 = vector.load %arg3[%c0_2, %c0_3, %c0_4] : memref<1x128x128xbf16, #tpu.memory_space<vmem>>, vector<1x128x128xbf16>
    %3 = vector.shape_cast %2 : vector<1x128x128xbf16> to vector<128x128xbf16>
    %c0_5 = arith.constant 0 : index
    %c0_6 = arith.constant 0 : index
    %4 = vector.load %arg4[%c0_5, %c0_6] : memref<128x128xbf16, #tpu.memory_space<vmem>>, vector<128x128xbf16>
    %cst = arith.constant dense<0.000000e+00> : vector<128x128xf32>
    %5 = tpu.matmul %1, %4, %cst {dimension_numbers = #tpu.dot_dimension_numbers<[1], [0], [0], [1], [0, 0, 1, 1], [], []>} : vector<128x128xbf16>, vector<128x128xbf16>, vector<128x128xf32> -> vector<128x128xf32>
    %c0_7 = arith.constant 0 : index
    %c0_8 = arith.constant 0 : index
    %6 = vector.load %arg5[%c0_7, %c0_8] : memref<1x128xf32, #tpu.memory_space<vmem>>, vector<1x128xf32>
    %7 = vector.broadcast %6 : vector<1x128xf32> to vector<128x128xf32>
    %8 = arith.addf %5, %7 : vector<128x128xf32>
    %c0_9 = arith.constant 0 : index
    %c0_10 = arith.constant 0 : index
    %9 = vector.load %arg6[%c0_9, %c0_10] : memref<128x256xbf16, #tpu.memory_space<vmem>>, vector<128x256xbf16>
    %cst_11 = arith.constant dense<0.000000e+00> : vector<128x256xf32>
    %10 = tpu.matmul %3, %9, %cst_11 {dimension_numbers = #tpu.dot_dimension_numbers<[1], [0], [0], [1], [0, 0, 1, 1], [], []>} : vector<128x128xbf16>, vector<128x256xbf16>, vector<128x256xf32> -> vector<128x256xf32>
    %c0_12 = arith.constant 0 : index
    %c0_13 = arith.constant 0 : index
    %11 = vector.load %arg7[%c0_12, %c0_13] : memref<1x256xf32, #tpu.memory_space<vmem>>, vector<1x256xf32>
    %12 = vector.broadcast %11 : vector<1x256xf32> to vector<128x256xf32>
    %13 = arith.addf %10, %12 : vector<128x256xf32>
    %14 = arith.truncf %8 : vector<128x128xf32> to vector<128x128xbf16>
    %c0_14 = arith.constant 0 : index
    %c0_15 = arith.constant 0 : index
    %c0_16 = arith.constant 0 : index
    %15 = vector.load %arg8[%c0_14, %c0_15, %c0_16] : memref<1x128x128xbf16, #tpu.memory_space<vmem>>, vector<1x128x128xbf16>
    %16 = vector.shape_cast %15 : vector<1x128x128xbf16> to vector<128x128xbf16>
    %17 = vector.shape_cast %14 : vector<128x128xbf16> to vector<1x128x128xbf16>
    tpu.vector_store %arg8[%c0_14, %c0_15, %c0_16], %17 {strides = array<i32>} : memref<1x128x128xbf16, #tpu.memory_space<vmem>>, vector<1x128x128xbf16>,
    %18 = arith.truncf %13 : vector<128x256xf32> to vector<128x256xbf16>
    %19 = vector.extract_strided_slice %18 {offsets = [0, 0], sizes = [128, 128], strides = [1, 1]} : vector<128x256xbf16> to vector<128x128xbf16>
    %c0_17 = arith.constant 0 : index
    %c0_18 = arith.constant 0 : index
    %c0_19 = arith.constant 0 : index
    %20 = vector.load %arg9[%c0_17, %c0_18, %c0_19] : memref<1x128x128xbf16, #tpu.memory_space<vmem>>, vector<1x128x128xbf16>
    %21 = vector.shape_cast %20 : vector<1x128x128xbf16> to vector<128x128xbf16>
    %22 = vector.shape_cast %19 : vector<128x128xbf16> to vector<1x128x128xbf16>
    tpu.vector_store %arg9[%c0_17, %c0_18, %c0_19], %22 {strides = array<i32>} : memref<1x128x128xbf16, #tpu.memory_space<vmem>>, vector<1x128x128xbf16>,
    %23 = vector.extract_strided_slice %18 {offsets = [0, 128], sizes = [128, 128], strides = [1, 1]} : vector<128x256xbf16> to vector<128x128xbf16>
    %c0_20 = arith.constant 0 : index
    %c0_21 = arith.constant 0 : index
    %c0_22 = arith.constant 0 : index
    %24 = vector.load %arg10[%c0_20, %c0_21, %c0_22] : memref<1x128x128xbf16, #tpu.memory_space<vmem>>, vector<1x128x128xbf16>
    %25 = vector.shape_cast %24 : vector<1x128x128xbf16> to vector<128x128xbf16>
    %26 = vector.shape_cast %23 : vector<128x128xbf16> to vector<1x128x128xbf16>
    tpu.vector_store %arg10[%c0_20, %c0_21, %c0_22], %26 {strides = array<i32>} : memref<1x128x128xbf16, #tpu.memory_space<vmem>>, vector<1x128x128xbf16>,
    return
  }
  func.func @transform_0(%arg0: i32, %arg1: i32) -> (i32, i32, i32) {
    %c0_i32 = arith.constant 0 : i32
    %c0_i32_0 = arith.constant 0 : i32
    return %arg0, %arg1, %c0_i32 : i32, i32, i32
  }
  func.func @transform_1(%arg0: i32, %arg1: i32) -> (i32, i32, i32) {
    %c0_i32 = arith.constant 0 : i32
    %c0_i32_0 = arith.constant 0 : i32
    return %arg0, %arg1, %c0_i32 : i32, i32, i32
  }
  func.func @transform_2(%arg0: i32, %arg1: i32) -> (i32, i32) {
    %c0_i32 = arith.constant 0 : i32
    %c0_i32_0 = arith.constant 0 : i32
    %c0_i32_1 = arith.constant 0 : i32
    return %c0_i32, %c0_i32_0 : i32, i32
  }
  func.func @transform_3(%arg0: i32, %arg1: i32) -> (i32, i32) {
    %c0_i32 = arith.constant 0 : i32
    %c0_i32_0 = arith.constant 0 : i32
    %c0_i32_1 = arith.constant 0 : i32
    return %c0_i32, %c0_i32_0 : i32, i32
  }
  func.func @transform_4(%arg0: i32, %arg1: i32) -> (i32, i32) {
    %c0_i32 = arith.constant 0 : i32
    %c0_i32_0 = arith.constant 0 : i32
    %c0_i32_1 = arith.constant 0 : i32
    return %c0_i32, %c0_i32_0 : i32, i32
  }
  func.func @transform_5(%arg0: i32, %arg1: i32) -> (i32, i32) {
    %c0_i32 = arith.constant 0 : i32
    %c0_i32_0 = arith.constant 0 : i32
    %c0_i32_1 = arith.constant 0 : i32
    return %c0_i32, %c0_i32_0 : i32, i32
  }
  func.func @transform_6(%arg0: i32, %arg1: i32) -> (i32, i32, i32) {
    %c0_i32 = arith.constant 0 : i32
    %c0_i32_0 = arith.constant 0 : i32
    return %arg0, %arg1, %c0_i32 : i32, i32, i32
  }
  func.func @transform_7(%arg0: i32, %arg1: i32) -> (i32, i32, i32) {
    %c0_i32 = arith.constant 0 : i32
    %c0_i32_0 = arith.constant 0 : i32
    return %arg0, %arg1, %c0_i32 : i32, i32, i32
  }
  func.func @transform_8(%arg0: i32, %arg1: i32) -> (i32, i32, i32) {
    %c0_i32 = arith.constant 0 : i32
    %c0_i32_0 = arith.constant 0 : i32
    return %arg0, %arg1, %c0_i32 : i32, i32, i32
  }
}

</mosaic_0001>

<llo_original>
// kernel: tpu_custom_call.1
$region0: #{tpu_custom_call.1}
  #allocation0 [shape = 'u32[]', space=smem, size = 0x4, offset = 0x4, fixed_abs, tag = 'smem constant byte address 0x4 - core index']
  #allocation1 [shape = 'u32[72,128]{1,0:T(1,128)}', space=vmem, size = 0x9000, scoped, tag = 'internal scratch']
  %s0 = inlined_call_operand.hbm [shape: bf16[2,128,128], index: 0, kind: input, shape index: {}]
  %s1 = inlined_call_operand.hbm [shape: bf16[2,128,128], index: 1, kind: input, shape index: {}]
  %s2 = inlined_call_operand.hbm [shape: bf16[128,128], index: 2, kind: input, shape index: {}]
  %s3 = inlined_call_operand.vmem [shape: f32[1,128], index: 3, kind: input, shape index: {}]
  %s4 = inlined_call_operand.hbm [shape: bf16[128,256], index: 4, kind: input, shape index: {}]
  %s5 = inlined_call_operand.vmem [shape: f32[1,256], index: 5, kind: input, shape index: {}]
  %s6 = inlined_call_operand.hbm [shape: bf16[2,128,128], index: 6, kind: output, shape index: {0}]
  %s7 = inlined_call_operand.hbm [shape: bf16[2,128,128], index: 7, kind: output, shape index: {1}]
  %s8 = inlined_call_operand.hbm [shape: bf16[2,128,128], index: 8, kind: output, shape index: {2}]
  %9 = xla_tuple %s6, %s7, %s8
  %s10 = sld [smem:[#allocation0]]
  $region89: #{tpu_custom_call.1} parent=0
    _
  %s12 = ssub.s32 1, %s10
  %s13 = scalar_select 0, %s12, %s10
  $region1: #{tpu_custom_call.1} parent=0
    #allocation2 [shape = 'u8[65536]{0}', space=vmem, size = 0x10000, scoped, tag = 'input window, operand 0']
    #allocation3 [shape = 's32[2]{0}', space=sflag, size = 0x8, scoped, tag = 'scoped memory for tpu_custom_call.1']
    #allocation4 [shape = 's32[2]{0}', space=sflag, size = 0x8, scoped, tag = 'scoped memory for tpu_custom_call.1']
    #allocation5 [shape = 'u8[65536]{0}', space=vmem, size = 0x10000, scoped, tag = 'input window, operand 1']
    #allocation6 [shape = 's32[2]{0}', space=sflag, size = 0x8, scoped, tag = 'scoped memory for tpu_custom_call.1']
    #allocation7 [shape = 'u8[32768]{0}', space=vmem, size = 0x8000, scoped, tag = 'input window, operand 2, single buffered']
    #allocation8 [shape = 'u8[65536]{0}', space=vmem, size = 0x10000, scoped, tag = 'input window, operand 4, single buffered']
    #allocation9 [shape = 's32[1]{0}', space=sflag, size = 0x4, scoped, tag = 'scoped memory for tpu_custom_call.1']
    #allocation10 [shape = 'u8[65536]{0}', space=vmem, size = 0x10000, scoped, tag = 'output window, operand 0']
    #allocation11 [shape = 'u8[65536]{0}', space=vmem, size = 0x10000, scoped, tag = 'output window, operand 1']
    #allocation12 [shape = 's32[2]{0}', space=sflag, size = 0x8, scoped, tag = 'scoped memory for tpu_custom_call.1']
    #allocation13 [shape = 'u8[65536]{0}', space=vmem, size = 0x10000, scoped, tag = 'output window, operand 2']
    %14 = vsyncpa [#allocation3], 0
    %s15 = scalar_lea.sflag [#allocation3], 1
    %16 = vsyncpa %s15, 0
    %17 = vsyncpa [#allocation6], 0
    %s18 = scalar_lea.sflag [#allocation6], 1
    %19 = vsyncpa %s18, 0
    %20 = vsyncpa [#allocation9], 0
    %21 = vsyncpa [#allocation4], 0
    %s22 = scalar_lea.sflag [#allocation4], 1
    %23 = vsyncpa %s22, 0
    %24 = vsyncpa [#allocation12], 0
    %s25 = scalar_lea.sflag [#allocation12], 1
    %26 = vsyncpa %s25, 0
    loop: start=0, step=1, limit=4
    $region2: #{tpu_custom_call.1} parent=1 // loop_pre_header
      _
    $region3: #{tpu_custom_call.1} parent=1 // loop_header
      %s28 = sphi 0, %s32
      %p29 = scmp.ge.s32.totalorder %s28, 4
      %s35 = sphi 0, %s47
      %s36 = sphi 0, %s43
      %s37 = sphi 0, %s35
      %s38 = sphi 0, %s36
      %s39 = sphi 0, %s37
      %s40 = sphi 0, %s38
      %s52 = sphi 0, %s54
      %s55 = sphi 0, %s52
      %s56 = sphi 0, %s55
      %s72 = sphi 0, %s56
      %s80 = sphi 0, %s82
      %s83 = sphi 0, %s80
      %s84 = sphi 0, %s83
      %s100 = sphi 0, %s84
      %s104 = sphi 0, %s104
      %s106 = sphi 0, %s104
      %s107 = sphi 0, %s106
      %s121 = sphi 0, %s107
      %s125 = sphi 0, %s125
      %s127 = sphi 0, %s125
      %s128 = sphi 0, %s127
      %s142 = sphi 0, %s128
      %s146 = sphi 0, %s146
      %s148 = sphi 0, %s146
      %s149 = sphi 0, %s148
      %s163 = sphi 0, %s149
      %s167 = sphi 0, %s167
      %s169 = sphi 0, %s167
      %s170 = sphi 0, %s169
      %s184 = sphi 0, %s170
      %s192 = sphi 0, %s194
      %s195 = sphi 0, %s192
      %s196 = sphi 0, %s195
      %s212 = sphi 0, %s196
      %s220 = sphi 0, %s222
      %s223 = sphi 0, %s220
      %s224 = sphi 0, %s223
      %s240 = sphi 0, %s224
      %s248 = sphi 0, %s250
      %s251 = sphi 0, %s248
      %s252 = sphi 0, %s251
      %s268 = sphi 0, %s252
    $region4: #{tpu_custom_call.1} parent=1 // loop_header_branch
      %31 = sbr.rel (%p29) target = $region8
    $region5: #{tpu_custom_call.1} parent=1 // loop_body
      %s33 = ssub.s32 %s28, 1
      %s34 = ssub.s32 %s28, 2
      %s41 = sadd.s32 1, %s36
      %p42 = scmp.ge.s32.totalorder %s41, 1
      %s43 = scalar_select %p42, 0, %s41
      %s44 = sadd.s32 1, %s35
      %s45 = scalar_select %p42, %s44, %s35
      %p46 = scmp.ge.s32.totalorder %s45, 2
      %s47 = scalar_select %p46, 0, %s45
      %s48 = ssub.s32 %s35, %s47
      %s49 = ssub.s32 %s36, %s43
      %s50 = sor.u32 %s48, %s49
      %p51 = scmp.eq.s32.totalorder %s50, 0
      %s53 = sadd.s32 %s52, 1
      %s54 = scalar_select %p51, %s52, %s53
      %p57 = pneg %p51
      %p58 = scmp.eq.s32.totalorder %s28, 1
      %p59 = por %p57, %p58
      %p60 = scmp.ne.s32.totalorder %s52, %s55
      %p61 = scmp.eq.s32.totalorder %s28, 0
      %p62 = por %p60, %p61
      %p63 = scmp.ne.s32.totalorder %s52, %s55
      %p64 = scmp.eq.s32.totalorder %s33, 1
      %p65 = por %p63, %p64
      %p66 = scmp.ne.s32.totalorder %s55, %s56
      %p67 = scmp.eq.s32.totalorder %s33, 0
      %p68 = por %p66, %p67
      %p69 = scmp.ne.s32.totalorder %s55, %s56
      %p70 = scmp.eq.s32.totalorder %s34, 1
      %p71 = por %p69, %p70
      %p73 = scmp.ne.s32.totalorder %s56, %s72
      %p74 = scmp.eq.s32.totalorder %s34, 0
      %p75 = por %p73, %p74
      %s76 = ssub.s32 %s35, %s47
      %s77 = ssub.s32 %s36, %s43
      %s78 = sor.u32 %s76, %s77
      %p79 = scmp.eq.s32.totalorder %s78, 0
      %s81 = sadd.s32 %s80, 1
      %s82 = scalar_select %p79, %s80, %s81
      %p85 = pneg %p79
      %p86 = scmp.eq.s32.totalorder %s28, 1
      %p87 = por %p85, %p86
      %p88 = scmp.ne.s32.totalorder %s80, %s83
      %p89 = scmp.eq.s32.totalorder %s28, 0
      %p90 = por %p88, %p89
      %p91 = scmp.ne.s32.totalorder %s80, %s83
      %p92 = scmp.eq.s32.totalorder %s33, 1
      %p93 = por %p91, %p92
      %p94 = scmp.ne.s32.totalorder %s83, %s84
      %p95 = scmp.eq.s32.totalorder %s33, 0
      %p96 = por %p94, %p95
      %p97 = scmp.ne.s32.totalorder %s83, %s84
      %p98 = scmp.eq.s32.totalorder %s34, 1
      %p99 = por %p97, %p98
      %p101 = scmp.ne.s32.totalorder %s84, %s100
      %p102 = scmp.eq.s32.totalorder %s34, 0
      %p103 = por %p101, %p102
      %s105 = sadd.s32 %s104, 1
      %p108 = scmp.eq.s32.totalorder %s28, 1
      %p109 = scmp.ne.s32.totalorder %s104, %s106
      %p110 = scmp.eq.s32.totalorder %s28, 0
      %p111 = por %p109, %p110
      %p112 = scmp.ne.s32.totalorder %s104, %s106
      %p113 = scmp.eq.s32.totalorder %s33, 1
      %p114 = por %p112, %p113
      %p115 = scmp.ne.s32.totalorder %s106, %s107
      %p116 = scmp.eq.s32.totalorder %s33, 0
      %p117 = por %p115, %p116
      %p118 = scmp.ne.s32.totalorder %s106, %s107
      %p119 = scmp.eq.s32.totalorder %s34, 1
      %p120 = por %p118, %p119
      %p122 = scmp.ne.s32.totalorder %s107, %s121
      %p123 = scmp.eq.s32.totalorder %s34, 0
      %p124 = por %p122, %p123
      %s126 = sadd.s32 %s125, 1
      %p129 = scmp.eq.s32.totalorder %s28, 1
      %p130 = scmp.ne.s32.totalorder %s125, %s127
      %p131 = scmp.eq.s32.totalorder %s28, 0
      %p132 = por %p130, %p131
      %p133 = scmp.ne.s32.totalorder %s125, %s127
      %p134 = scmp.eq.s32.totalorder %s33, 1
      %p135 = por %p133, %p134
      %p136 = scmp.ne.s32.totalorder %s127, %s128
      %p137 = scmp.eq.s32.totalorder %s33, 0
      %p138 = por %p136, %p137
      %p139 = scmp.ne.s32.totalorder %s127, %s128
      %p140 = scmp.eq.s32.totalorder %s34, 1
      %p141 = por %p139, %p140
      %p143 = scmp.ne.s32.totalorder %s128, %s142
      %p144 = scmp.eq.s32.totalorder %s34, 0
      %p145 = por %p143, %p144
      %s147 = sadd.s32 %s146, 1
      %p150 = scmp.eq.s32.totalorder %s28, 1
      %p151 = scmp.ne.s32.totalorder %s146, %s148
      %p152 = scmp.eq.s32.totalorder %s28, 0
      %p153 = por %p151, %p152
      %p154 = scmp.ne.s32.totalorder %s146, %s148
      %p155 = scmp.eq.s32.totalorder %s33, 1
      %p156 = por %p154, %p155
      %p157 = scmp.ne.s32.totalorder %s148, %s149
      %p158 = scmp.eq.s32.totalorder %s33, 0
      %p159 = por %p157, %p158
      %p160 = scmp.ne.s32.totalorder %s148, %s149
      %p161 = scmp.eq.s32.totalorder %s34, 1
      %p162 = por %p160, %p161
      %p164 = scmp.ne.s32.totalorder %s149, %s163
      %p165 = scmp.eq.s32.totalorder %s34, 0
      %p166 = por %p164, %p165
      %s168 = sadd.s32 %s167, 1
      %p171 = scmp.eq.s32.totalorder %s28, 1
      %p172 = scmp.ne.s32.totalorder %s167, %s169
      %p173 = scmp.eq.s32.totalorder %s28, 0
      %p174 = por %p172, %p173
      %p175 = scmp.ne.s32.totalorder %s167, %s169
      %p176 = scmp.eq.s32.totalorder %s33, 1
      %p177 = por %p175, %p176
      %p178 = scmp.ne.s32.totalorder %s169, %s170
      %p179 = scmp.eq.s32.totalorder %s33, 0
      %p180 = por %p178, %p179
      %p181 = scmp.ne.s32.totalorder %s169, %s170
      %p182 = scmp.eq.s32.totalorder %s34, 1
      %p183 = por %p181, %p182
      %p185 = scmp.ne.s32.totalorder %s170, %s184
      %p186 = scmp.eq.s32.totalorder %s34, 0
      %p187 = por %p185, %p186
      %s188 = ssub.s32 %s35, %s47
      %s189 = ssub.s32 %s36, %s43
      %s190 = sor.u32 %s188, %s189
      %p191 = scmp.eq.s32.totalorder %s190, 0
      %s193 = sadd.s32 %s192, 1
      %s194 = scalar_select %p191, %s192, %s193
      %p197 = pneg %p191
      %p198 = scmp.eq.s32.totalorder %s28, 1
      %p199 = por %p197, %p198
      %p200 = scmp.ne.s32.totalorder %s192, %s195
      %p201 = scmp.eq.s32.totalorder %s28, 0
      %p202 = por %p200, %p201
      %p203 = scmp.ne.s32.totalorder %s192, %s195
      %p204 = scmp.eq.s32.totalorder %s33, 1
      %p205 = por %p203, %p204
      %p206 = scmp.ne.s32.totalorder %s195, %s196
      %p207 = scmp.eq.s32.totalorder %s33, 0
      %p208 = por %p206, %p207
      %p209 = scmp.ne.s32.totalorder %s195, %s196
      %p210 = scmp.eq.s32.totalorder %s34, 1
      %p211 = por %p209, %p210
      %p213 = scmp.ne.s32.totalorder %s196, %s212
      %p214 = scmp.eq.s32.totalorder %s34, 0
      %p215 = por %p213, %p214
      %s216 = ssub.s32 %s35, %s47
      %s217 = ssub.s32 %s36, %s43
      %s218 = sor.u32 %s216, %s217
      %p219 = scmp.eq.s32.totalorder %s218, 0
      %s221 = sadd.s32 %s220, 1
      %s222 = scalar_select %p219, %s220, %s221
      %p225 = pneg %p219
      %p226 = scmp.eq.s32.totalorder %s28, 1
      %p227 = por %p225, %p226
      %p228 = scmp.ne.s32.totalorder %s220, %s223
      %p229 = scmp.eq.s32.totalorder %s28, 0
      %p230 = por %p228, %p229
      %p231 = scmp.ne.s32.totalorder %s220, %s223
      %p232 = scmp.eq.s32.totalorder %s33, 1
      %p233 = por %p231, %p232
      %p234 = scmp.ne.s32.totalorder %s223, %s224
      %p235 = scmp.eq.s32.totalorder %s33, 0
      %p236 = por %p234, %p235
      %p237 = scmp.ne.s32.totalorder %s223, %s224
      %p238 = scmp.eq.s32.totalorder %s34, 1
      %p239 = por %p237, %p238
      %p241 = scmp.ne.s32.totalorder %s224, %s240
      %p242 = scmp.eq.s32.totalorder %s34, 0
      %p243 = por %p241, %p242
      %s244 = ssub.s32 %s35, %s47
      %s245 = ssub.s32 %s36, %s43
      %s246 = sor.u32 %s244, %s245
      %p247 = scmp.eq.s32.totalorder %s246, 0
      %s249 = sadd.s32 %s248, 1
      %s250 = scalar_select %p247, %s248, %s249
      %p253 = pneg %p247
      %p254 = scmp.eq.s32.totalorder %s28, 1
      %p255 = por %p253, %p254
      %p256 = scmp.ne.s32.totalorder %s248, %s251
      %p257 = scmp.eq.s32.totalorder %s28, 0
      %p258 = por %p256, %p257
      %p259 = scmp.ne.s32.totalorder %s248, %s251
      %p260 = scmp.eq.s32.totalorder %s33, 1
      %p261 = por %p259, %p260
      %p262 = scmp.ne.s32.totalorder %s251, %s252
      %p263 = scmp.eq.s32.totalorder %s33, 0
      %p264 = por %p262, %p263
      %p265 = scmp.ne.s32.totalorder %s251, %s252
      %p266 = scmp.eq.s32.totalorder %s34, 1
      %p267 = por %p265, %p266
      %p269 = scmp.ne.s32.totalorder %s252, %s268
      %p270 = scmp.eq.s32.totalorder %s34, 0
      %p271 = por %p269, %p270
      %p272 = scmp.le.s32.totalorder 1, %s28
      %p273 = scmp.lt.s32.totalorder %s28, 3
      %p274 = pnand %p272, %p273
      %p275 = pneg %p274
      // Predicated region
      $region9: #{tpu_custom_call.1} parent=5 // pred_check
        _
      $region10: #{tpu_custom_call.1} parent=5 // pred_check_branch
        %277 = sbr.rel (%p274) target = $region12
      $region11: #{tpu_custom_call.1} parent=5 // pred_region
        %s278 = ssub.s32 %s28, 1
        // Predicated region
        $region13: #{tpu_custom_call.1} parent=11 // pred_check
          %p279 = pneg %p117
        $region14: #{tpu_custom_call.1} parent=11 // pred_check_branch
          %281 = sbr.rel (%p279) target = $region16
        $region15: #{tpu_custom_call.1} parent=11 // pred_region
          %283 = vsyncadd [#allocation6], 0
          %s284 = sshll.u32 %s2, 4
          %s285 = int_to_ptr.hbm [resolvable:$true] %s284
          %s286 = sshll.u32 [#allocation7], 4
          %s287 = int_to_ptr.vmem [resolvable:$true] %s286
          %292 = dma.hbm_to_vmem [thread:$0]  %s285, 1024, %s287, [#allocation6], 64, 64, 4
        $region16: #{tpu_custom_call.1} parent=11 // pred_fallthru
          _
        // Predicated region
        $region17: #{tpu_custom_call.1} parent=11 // pred_check
          %p293 = pneg %p138
        $region18: #{tpu_custom_call.1} parent=11 // pred_check_branch
          %295 = sbr.rel (%p293) target = $region20
        $region19: #{tpu_custom_call.1} parent=11 // pred_region
          _
        $region20: #{tpu_custom_call.1} parent=11 // pred_fallthru
          _
        // Predicated region
        $region21: #{tpu_custom_call.1} parent=11 // pred_check
          %p296 = pneg %p159
        $region22: #{tpu_custom_call.1} parent=11 // pred_check_branch
          %298 = sbr.rel (%p296) target = $region24
        $region23: #{tpu_custom_call.1} parent=11 // pred_region
          %300 = vsyncadd [#allocation9], 0
          %s301 = sshll.u32 %s4, 4
          %s302 = int_to_ptr.hbm [resolvable:$true] %s301
          %s303 = sshll.u32 [#allocation8], 4
          %s304 = int_to_ptr.vmem [resolvable:$true] %s303
          %309 = dma.hbm_to_vmem [thread:$0]  %s302, 2048, %s304, [#allocation9], 128, 128, 8
        $region24: #{tpu_custom_call.1} parent=11 // pred_fallthru
          _
        // Predicated region
        $region25: #{tpu_custom_call.1} parent=11 // pred_check
          %p310 = pneg %p180
        $region26: #{tpu_custom_call.1} parent=11 // pred_check_branch
          %312 = sbr.rel (%p310) target = $region28
        $region27: #{tpu_custom_call.1} parent=11 // pred_region
          _
        $region28: #{tpu_custom_call.1} parent=11 // pred_fallthru
          _
      $region12: #{tpu_custom_call.1} parent=5 // pred_fallthru
        _
      %p313 = scmp.lt.s32.totalorder %s28, 2
      // Predicated region
      $region29: #{tpu_custom_call.1} parent=5 // pred_check
        %p314 = pneg %p313
      $region30: #{tpu_custom_call.1} parent=5 // pred_check_branch
        %316 = sbr.rel (%p314) target = $region32
      $region31: #{tpu_custom_call.1} parent=5 // pred_region
        // Predicated region
        $region33: #{tpu_custom_call.1} parent=31 // pred_check
          %p317 = pneg %p62
        $region34: #{tpu_custom_call.1} parent=31 // pred_check_branch
          %319 = sbr.rel (%p317) target = $region36
        $region35: #{tpu_custom_call.1} parent=31 // pred_region
          %s320 = sand.u32 %s52, 1
          %s321 = scalar_lea.sflag [#allocation3], %s320
          %s322 = sand.u32 %s52, 1
          %s323 = smul.addr %s322, 64
          %s324 = scalar_lea.vmem [#allocation2], %s323
          %s325 = smul.u32 16, %s36
          %327 = vsyncadd %s321, 0
          %s328 = smul.addr %s35, 16
          %s329 = sadd.s32 %s325, %s328
          %s330 = smul.addr %s329, 4
          %s331 = scalar_lea.hbm %s0, %s330
          %s332 = sshll.u32 %s331, 4
          %s333 = int_to_ptr.hbm [resolvable:$true] %s332
          %s334 = sshll.u32 %s324, 4
          %s335 = int_to_ptr.vmem [resolvable:$true] %s334
          %340 = dma.hbm_to_vmem [thread:$0]  %s333, 1024, %s335, %s321, 64, 64, 4
        $region36: #{tpu_custom_call.1} parent=31 // pred_fallthru
          _
        // Predicated region
        $region37: #{tpu_custom_call.1} parent=31 // pred_check
          %p341 = pneg %p90
        $region38: #{tpu_custom_call.1} parent=31 // pred_check_branch
          %343 = sbr.rel (%p341) target = $region40
        $region39: #{tpu_custom_call.1} parent=31 // pred_region
          %s344 = sand.u32 %s28, 1
          %s345 = scalar_lea.sflag [#allocation6], %s344
          %s346 = sand.u32 %s80, 1
          %s347 = smul.addr %s346, 64
          %s348 = scalar_lea.vmem [#allocation5], %s347
          %s349 = smul.u32 16, %s36
          %351 = vsyncadd %s345, 0
          %s352 = smul.addr %s35, 16
          %s353 = sadd.s32 %s349, %s352
          %s354 = smul.addr %s353, 4
          %s355 = scalar_lea.hbm %s1, %s354
          %s356 = sshll.u32 %s355, 4
          %s357 = int_to_ptr.hbm [resolvable:$true] %s356
          %s358 = sshll.u32 %s348, 4
          %s359 = int_to_ptr.vmem [resolvable:$true] %s358
          %364 = dma.hbm_to_vmem [thread:$0]  %s357, 1024, %s359, %s345, 64, 64, 4
        $region40: #{tpu_custom_call.1} parent=31 // pred_fallthru
          _
      $region32: #{tpu_custom_call.1} parent=5 // pred_fallthru
        _
      %p365 = scmp.le.s32.totalorder 1, %s28
      %p366 = scmp.lt.s32.totalorder %s28, 3
      %p367 = pnand %p365, %p366
      %p368 = pneg %p367
      // Predicated region
      $region41: #{tpu_custom_call.1} parent=5 // pred_check
        _
      $region42: #{tpu_custom_call.1} parent=5 // pred_check_branch
        %370 = sbr.rel (%p367) target = $region44
      $region43: #{tpu_custom_call.1} parent=5 // pred_region
        %s371 = ssub.s32 %s28, 1
        %s372 = sand.u32 %s55, 1
        %s373 = scalar_lea.sflag [#allocation3], %s372
        %s374 = sand.u32 %s55, 1
        %s375 = smul.addr %s374, 64
        %s376 = scalar_lea.vmem [#allocation2], %s375
        // Predicated region
        $region45: #{tpu_custom_call.1} parent=43 // pred_check
          %p377 = pneg %p68
        $region46: #{tpu_custom_call.1} parent=43 // pred_check_branch
          %379 = sbr.rel (%p377) target = $region48
        $region47: #{tpu_custom_call.1} parent=43 // pred_region
          %381 = dma.done %s373, 1024
        $region48: #{tpu_custom_call.1} parent=43 // pred_fallthru
          _
        %s382 = sand.u32 %s33, 1
        %s383 = scalar_lea.sflag [#allocation6], %s382
        %s384 = sand.u32 %s83, 1
        %s385 = smul.addr %s384, 64
        %s386 = scalar_lea.vmem [#allocation5], %s385
        // Predicated region
        $region49: #{tpu_custom_call.1} parent=43 // pred_check
          %p387 = pneg %p96
        $region50: #{tpu_custom_call.1} parent=43 // pred_check_branch
          %389 = sbr.rel (%p387) target = $region52
        $region51: #{tpu_custom_call.1} parent=43 // pred_region
          %391 = dma.done %s383, 1024
        $region52: #{tpu_custom_call.1} parent=43 // pred_fallthru
          _
        // Predicated region
        $region53: #{tpu_custom_call.1} parent=43 // pred_check
          %p392 = pneg %p117
        $region54: #{tpu_custom_call.1} parent=43 // pred_check_branch
          %394 = sbr.rel (%p392) target = $region56
        $region55: #{tpu_custom_call.1} parent=43 // pred_region
          %396 = dma.done [#allocation6], 1024
        $region56: #{tpu_custom_call.1} parent=43 // pred_fallthru
          _
        // Predicated region
        $region57: #{tpu_custom_call.1} parent=43 // pred_check
          %p397 = pneg %p159
        $region58: #{tpu_custom_call.1} parent=43 // pred_check_branch
          %399 = sbr.rel (%p397) target = $region60
        $region59: #{tpu_custom_call.1} parent=43 // pred_region
          %401 = dma.done [#allocation9], 2048
        $region60: #{tpu_custom_call.1} parent=43 // pred_fallthru
          _
        %s402 = sand.u32 %s55, 1
        %s403 = scalar_lea.sflag [#allocation3], %s402
        %s404 = sand.u32 %s55, 1
        %s405 = smul.addr %s404, 64
        %s406 = scalar_lea.vmem [#allocation2], %s405
        %p407 = pneg %p68
        %p408 = pneg %p65
        %s409 = sand.u32 %s33, 1
        %s410 = scalar_lea.sflag [#allocation6], %s409
        %s411 = sand.u32 %s83, 1
        %s412 = smul.addr %s411, 64
        %s413 = scalar_lea.vmem [#allocation5], %s412
        %p414 = pneg %p96
        %p415 = pneg %p93
        %p416 = pneg %p117
        %p417 = pneg %p114
        %p418 = pneg %p138
        %p419 = pneg %p135
        %p420 = pneg %p159
        %p421 = pneg %p156
        %p422 = pneg %p180
        %p423 = pneg %p177
        %p424 = pneg %p208
        %p425 = pneg %p205
        %s426 = sand.u32 %s195, 1
        %s427 = scalar_lea.sflag [#allocation4], %s426
        %s428 = sand.u32 %s195, 1
        %s429 = smul.addr %s428, 64
        %s430 = scalar_lea.vmem [#allocation10], %s429
        %p431 = pneg %p236
        %p432 = pneg %p233
        %s433 = sand.u32 %s33, 1
        %s434 = scalar_lea.sflag [#allocation12], %s433
        %s435 = sand.u32 %s223, 1
        %s436 = smul.addr %s435, 64
        %s437 = scalar_lea.vmem [#allocation11], %s436
        %p438 = pneg %p264
        %p439 = pneg %p261
        %s440 = sand.u32 %s33, 1
        %s441 = scalar_lea.sflag [#allocation12], %s440
        %s442 = sand.u32 %s251, 1
        %s443 = smul.addr %s442, 64
        %s444 = scalar_lea.vmem [#allocation13], %s443
        %s445 = smul.u32 16, %s38
        %s446 = smul.u32 16, %s38
        %s447 = smul.u32 16, %s38
        %s448 = smul.u32 16, %s38
        %s449 = smul.u32 16, %s38
        %v450 = vld [vmem:[%s376] sm:$0xf]
        %v451 = vld [vmem:[%s376 + $0x4] sm:$0xf]
        %v452 = vld [vmem:[%s376 + $0x8] sm:$0xf]
        %v453 = vld [vmem:[%s376 + $0xc] sm:$0xf]
        %v454 = vld [vmem:[%s376 + $0x10] sm:$0xf]
        %v455 = vld [vmem:[%s376 + $0x14] sm:$0xf]
        %v456 = vld [vmem:[%s376 + $0x18] sm:$0xf]
        %v457 = vld [vmem:[%s376 + $0x1c] sm:$0xf]
        %v458 = vld [vmem:[%s376 + $0x20] sm:$0xf]
        %v459 = vld [vmem:[%s376 + $0x24] sm:$0xf]
        %v460 = vld [vmem:[%s376 + $0x28] sm:$0xf]
        %v461 = vld [vmem:[%s376 + $0x2c] sm:$0xf]
        %v462 = vld [vmem:[%s376 + $0x30] sm:$0xf]
        %v463 = vld [vmem:[%s376 + $0x34] sm:$0xf]
        %v464 = vld [vmem:[%s376 + $0x38] sm:$0xf]
        %v465 = vld [vmem:[%s376 + $0x3c] sm:$0xf]
        %v466 = vld [vmem:[%s386] sm:$0xf]
        %v467 = vld [vmem:[%s386 + $0x4] sm:$0xf]
        %v468 = vld [vmem:[%s386 + $0x8] sm:$0xf]
        %v469 = vld [vmem:[%s386 + $0xc] sm:$0xf]
        %v470 = vld [vmem:[%s386 + $0x10] sm:$0xf]
        %v471 = vld [vmem:[%s386 + $0x14] sm:$0xf]
        %v472 = vld [vmem:[%s386 + $0x18] sm:$0xf]
        %v473 = vld [vmem:[%s386 + $0x1c] sm:$0xf]
        %v474 = vld [vmem:[%s386 + $0x20] sm:$0xf]
        %v475 = vld [vmem:[%s386 + $0x24] sm:$0xf]
        %v476 = vld [vmem:[%s386 + $0x28] sm:$0xf]
        %v477 = vld [vmem:[%s386 + $0x2c] sm:$0xf]
        %v478 = vld [vmem:[%s386 + $0x30] sm:$0xf]
        %v479 = vld [vmem:[%s386 + $0x34] sm:$0xf]
        %v480 = vld [vmem:[%s386 + $0x38] sm:$0xf]
        %v481 = vld [vmem:[%s386 + $0x3c] sm:$0xf]
        %v482 = vld [vmem:[#allocation7] sm:$0xf]
        %v483 = vld [vmem:[#allocation7 + $0x4] sm:$0xf]
        %v484 = vld [vmem:[#allocation7 + $0x8] sm:$0xf]
        %v485 = vld [vmem:[#allocation7 + $0xc] sm:$0xf]
        %v486 = vld [vmem:[#allocation7 + $0x10] sm:$0xf]
        %v487 = vld [vmem:[#allocation7 + $0x14] sm:$0xf]
        %v488 = vld [vmem:[#allocation7 + $0x18] sm:$0xf]
        %v489 = vld [vmem:[#allocation7 + $0x1c] sm:$0xf]
        %v490 = vld [vmem:[#allocation7 + $0x20] sm:$0xf]
        %v491 = vld [vmem:[#allocation7 + $0x24] sm:$0xf]
        %v492 = vld [vmem:[#allocation7 + $0x28] sm:$0xf]
        %v493 = vld [vmem:[#allocation7 + $0x2c] sm:$0xf]
        %v494 = vld [vmem:[#allocation7 + $0x30] sm:$0xf]
        %v495 = vld [vmem:[#allocation7 + $0x34] sm:$0xf]
        %v496 = vld [vmem:[#allocation7 + $0x38] sm:$0xf]
        %v497 = vld [vmem:[#allocation7 + $0x3c] sm:$0xf]
        %v498 = vld [vmem:[%s3] sm:$0x1]
        %v500 = vperm.slane %v498, 0
        %v518 = vunpack.c.l.b16 %v450
        %v519 = vunpack.c.l.b16 %v451
        %v520 = vunpack.c.l.b16 %v452
        %v521 = vunpack.c.l.b16 %v453
        %v522 = vunpack.c.l.b16 %v454
        %v523 = vunpack.c.l.b16 %v455
        %v524 = vunpack.c.l.b16 %v456
        %v525 = vunpack.c.l.b16 %v457
        %v526 = vunpack.c.l.b16 %v458
        %v527 = vunpack.c.l.b16 %v459
        %v528 = vunpack.c.l.b16 %v460
        %v529 = vunpack.c.l.b16 %v461
        %v530 = vunpack.c.l.b16 %v462
        %v531 = vunpack.c.l.b16 %v463
        %v532 = vunpack.c.l.b16 %v464
        %v533 = vunpack.c.l.b16 %v465
        %v534 = vpack.c.b16 %v519, %v518
        %v535 = vpack.c.b16 %v521, %v520
        %v536 = vpack.c.b16 %v523, %v522
        %v537 = vpack.c.b16 %v525, %v524
        %v538 = vpack.c.b16 %v527, %v526
        %v539 = vpack.c.b16 %v529, %v528
        %v540 = vpack.c.b16 %v531, %v530
        %v541 = vpack.c.b16 %v533, %v532
        %v566 = vunpack.c.l.b16 %v482
        %v567 = vunpack.c.l.b16 %v483
        %v568 = vunpack.c.l.b16 %v484
        %v569 = vunpack.c.l.b16 %v485
        %v570 = vunpack.c.l.b16 %v486
        %v571 = vunpack.c.l.b16 %v487
        %v572 = vunpack.c.l.b16 %v488
        %v573 = vunpack.c.l.b16 %v489
        %v574 = vunpack.c.l.b16 %v490
        %v575 = vunpack.c.l.b16 %v491
        %v576 = vunpack.c.l.b16 %v492
        %v577 = vunpack.c.l.b16 %v493
        %v578 = vunpack.c.l.b16 %v494
        %v579 = vunpack.c.l.b16 %v495
        %v580 = vunpack.c.l.b16 %v496
        %v581 = vunpack.c.l.b16 %v497
        %v582 = vpack.c.b16 %v567, %v566
        %v583 = vpack.c.b16 %v569, %v568
        %v584 = vpack.c.b16 %v571, %v570
        %v585 = vpack.c.b16 %v573, %v572
        %v586 = vpack.c.b16 %v575, %v574
        %v587 = vpack.c.b16 %v577, %v576
        %v588 = vpack.c.b16 %v579, %v578
        %v589 = vpack.c.b16 %v581, %v580
        %598 = vmatpush.bf16.msra.mxu0 %v589
        %599 = vmatpush.bf16.msra.mxu0 %v588
        %600 = vmatpush.bf16.msra.mxu0 %v587
        %601 = vmatpush.bf16.msra.mxu0 %v586
        %602 = vmatpush.bf16.msra.mxu0 %v585
        %603 = vmatpush.bf16.msra.mxu0 %v584
        %604 = vmatpush.bf16.msra.mxu0 %v583
        %605 = vmatpush.bf16.msra.mxu0 %v582
        %606 = vmatmul.bf16.gmra.mxu0 %v534
        %v607 = vpop.f32.mrf.mxu0
        %v608 = vadd.f32 %v500, %v607
        %v609 = vpop.f32.mrf.mxu0
        %v610 = vadd.f32 %v500, %v609
        %611 = vmatmul.bf16.gmra.mxu0 %v535
        %v612 = vpop.f32.mrf.mxu0
        %v613 = vadd.f32 %v500, %v612
        %v614 = vpop.f32.mrf.mxu0
        %v615 = vadd.f32 %v500, %v614
        %616 = vmatmul.bf16.gmra.mxu0 %v536
        %v617 = vpop.f32.mrf.mxu0
        %v618 = vadd.f32 %v500, %v617
        %v619 = vpop.f32.mrf.mxu0
        %v620 = vadd.f32 %v500, %v619
        %621 = vmatmul.bf16.gmra.mxu0 %v537
        %v622 = vpop.f32.mrf.mxu0
        %v623 = vadd.f32 %v500, %v622
        %v624 = vpop.f32.mrf.mxu0
        %v625 = vadd.f32 %v500, %v624
        %626 = vmatmul.bf16.gmra.mxu0 %v538
        %v627 = vpop.f32.mrf.mxu0
        %v628 = vadd.f32 %v500, %v627
        %v629 = vpop.f32.mrf.mxu0
        %v630 = vadd.f32 %v500, %v629
        %631 = vmatmul.bf16.gmra.mxu0 %v539
        %v632 = vpop.f32.mrf.mxu0
        %v633 = vadd.f32 %v500, %v632
        %v634 = vpop.f32.mrf.mxu0
        %v635 = vadd.f32 %v500, %v634
        %636 = vmatmul.bf16.gmra.mxu0 %v540
        %v637 = vpop.f32.mrf.mxu0
        %v638 = vadd.f32 %v500, %v637
        %v639 = vpop.f32.mrf.mxu0
        %v640 = vadd.f32 %v500, %v639
        %641 = vmatmul.bf16.gmra.mxu0 %v541
        %v642 = vpop.f32.mrf.mxu0
        %v643 = vadd.f32 %v500, %v642
        %v644 = vpop.f32.mrf.mxu0
        %v645 = vadd.f32 %v500, %v644
        %646 = vdwg.mxu0
        %v647 = vld [vmem:[#allocation8] sm:$0xff]
        %v648 = vld [vmem:[#allocation8 + $0x8] sm:$0xff]
        %v649 = vld [vmem:[#allocation8 + $0x10] sm:$0xff]
        %v650 = vld [vmem:[#allocation8 + $0x18] sm:$0xff]
        %v651 = vld [vmem:[#allocation8 + $0x20] sm:$0xff]
        %v652 = vld [vmem:[#allocation8 + $0x28] sm:$0xff]
        %v653 = vld [vmem:[#allocation8 + $0x30] sm:$0xff]
        %v654 = vld [vmem:[#allocation8 + $0x38] sm:$0xff]
        %v655 = vld [vmem:[#allocation8 + $0x40] sm:$0xff]
        %v656 = vld [vmem:[#allocation8 + $0x48] sm:$0xff]
        %v657 = vld [vmem:[#allocation8 + $0x50] sm:$0xff]
        %v658 = vld [vmem:[#allocation8 + $0x58] sm:$0xff]
        %v659 = vld [vmem:[#allocation8 + $0x60] sm:$0xff]
        %v660 = vld [vmem:[#allocation8 + $0x68] sm:$0xff]
        %v661 = vld [vmem:[#allocation8 + $0x70] sm:$0xff]
        %v662 = vld [vmem:[#allocation8 + $0x78] sm:$0xff]
        %v663 = vld [vmem:[%s5] sm:$0x3]
        %v665 = vperm.slane %v663, 0
        %v666 = vperm.slane %v663, 1
        %v685 = vunpack.c.l.b16 %v466
        %v686 = vunpack.c.l.b16 %v467
        %v687 = vunpack.c.l.b16 %v468
        %v688 = vunpack.c.l.b16 %v469
        %v689 = vunpack.c.l.b16 %v470
        %v690 = vunpack.c.l.b16 %v471
        %v691 = vunpack.c.l.b16 %v472
        %v692 = vunpack.c.l.b16 %v473
        %v693 = vunpack.c.l.b16 %v474
        %v694 = vunpack.c.l.b16 %v475
        %v695 = vunpack.c.l.b16 %v476
        %v696 = vunpack.c.l.b16 %v477
        %v697 = vunpack.c.l.b16 %v478
        %v698 = vunpack.c.l.b16 %v479
        %v699 = vunpack.c.l.b16 %v480
        %v700 = vunpack.c.l.b16 %v481
        %v701 = vpack.c.b16 %v686, %v685
        %v702 = vpack.c.b16 %v688, %v687
        %v703 = vpack.c.b16 %v690, %v689
        %v704 = vpack.c.b16 %v692, %v691
        %v705 = vpack.c.b16 %v694, %v693
        %v706 = vpack.c.b16 %v696, %v695
        %v707 = vpack.c.b16 %v698, %v697
        %v708 = vpack.c.b16 %v700, %v699
        %v733 = vunpack.c.l.b16 %v647
        %v734 = vunpack.c.h.b16 %v647
        %v735 = vunpack.c.l.b16 %v648
        %v736 = vunpack.c.h.b16 %v648
        %v737 = vunpack.c.l.b16 %v649
        %v738 = vunpack.c.h.b16 %v649
        %v739 = vunpack.c.l.b16 %v650
        %v740 = vunpack.c.h.b16 %v650
        %v741 = vunpack.c.l.b16 %v651
        %v742 = vunpack.c.h.b16 %v651
        %v743 = vunpack.c.l.b16 %v652
        %v744 = vunpack.c.h.b16 %v652
        %v745 = vunpack.c.l.b16 %v653
        %v746 = vunpack.c.h.b16 %v653
        %v747 = vunpack.c.l.b16 %v654
        %v748 = vunpack.c.h.b16 %v654
        %v749 = vunpack.c.l.b16 %v655
        %v750 = vunpack.c.h.b16 %v655
        %v751 = vunpack.c.l.b16 %v656
        %v752 = vunpack.c.h.b16 %v656
        %v753 = vunpack.c.l.b16 %v657
        %v754 = vunpack.c.h.b16 %v657
        %v755 = vunpack.c.l.b16 %v658
        %v756 = vunpack.c.h.b16 %v658
        %v757 = vunpack.c.l.b16 %v659
        %v758 = vunpack.c.h.b16 %v659
        %v759 = vunpack.c.l.b16 %v660
        %v760 = vunpack.c.h.b16 %v660
        %v761 = vunpack.c.l.b16 %v661
        %v762 = vunpack.c.h.b16 %v661
        %v763 = vunpack.c.l.b16 %v662
        %v764 = vunpack.c.h.b16 %v662
        %v765 = vpack.c.b16 %v735, %v733
        %v766 = vpack.c.b16 %v736, %v734
        %v767 = vpack.c.b16 %v739, %v737
        %v768 = vpack.c.b16 %v740, %v738
        %v769 = vpack.c.b16 %v743, %v741
        %v770 = vpack.c.b16 %v744, %v742
        %v771 = vpack.c.b16 %v747, %v745
        %v772 = vpack.c.b16 %v748, %v746
        %v773 = vpack.c.b16 %v751, %v749
        %v774 = vpack.c.b16 %v752, %v750
        %v775 = vpack.c.b16 %v755, %v753
        %v776 = vpack.c.b16 %v756, %v754
        %v777 = vpack.c.b16 %v759, %v757
        %v778 = vpack.c.b16 %v760, %v758
        %v779 = vpack.c.b16 %v763, %v761
        %v780 = vpack.c.b16 %v764, %v762
        %797 = vmatpush.bf16.msra.mxu0 %v779
        %798 = vmatpush.bf16.msra.mxu0 %v777
        %799 = vmatpush.bf16.msra.mxu0 %v775
        %800 = vmatpush.bf16.msra.mxu0 %v773
        %801 = vmatpush.bf16.msra.mxu0 %v771
        %802 = vmatpush.bf16.msra.mxu0 %v769
        %803 = vmatpush.bf16.msra.mxu0 %v767
        %804 = vmatpush.bf16.msra.mxu0 %v765
        %805 = vmatmul.bf16.gmra.mxu0 %v701
        %v806 = vpop.f32.mrf.mxu0
        %v807 = vadd.f32 %v665, %v806
        %v808 = vpop.f32.mrf.mxu0
        %v809 = vadd.f32 %v665, %v808
        %810 = vmatmul.bf16.gmra.mxu0 %v702
        %v811 = vpop.f32.mrf.mxu0
        %v812 = vadd.f32 %v665, %v811
        %v813 = vpop.f32.mrf.mxu0
        %v814 = vadd.f32 %v665, %v813
        %815 = vmatmul.bf16.gmra.mxu0 %v703
        %v816 = vpop.f32.mrf.mxu0
        %v817 = vadd.f32 %v665, %v816
        %v818 = vpop.f32.mrf.mxu0
        %v819 = vadd.f32 %v665, %v818
        %820 = vmatmul.bf16.gmra.mxu0 %v704
        %v821 = vpop.f32.mrf.mxu0
        %v822 = vadd.f32 %v665, %v821
        %v823 = vpop.f32.mrf.mxu0
        %v824 = vadd.f32 %v665, %v823
        %825 = vmatmul.bf16.gmra.mxu0 %v705
        %v826 = vpop.f32.mrf.mxu0
        %v827 = vadd.f32 %v665, %v826
        %v828 = vpop.f32.mrf.mxu0
        %v829 = vadd.f32 %v665, %v828
        %830 = vmatmul.bf16.gmra.mxu0 %v706
        %v831 = vpop.f32.mrf.mxu0
        %v832 = vadd.f32 %v665, %v831
        %v833 = vpop.f32.mrf.mxu0
        %v834 = vadd.f32 %v665, %v833
        %835 = vmatmul.bf16.gmra.mxu0 %v707
        %v836 = vpop.f32.mrf.mxu0
        %v837 = vadd.f32 %v665, %v836
        %v838 = vpop.f32.mrf.mxu0
        %v839 = vadd.f32 %v665, %v838
        %840 = vmatmul.bf16.gmra.mxu0 %v708
        %v841 = vpop.f32.mrf.mxu0
        %v842 = vadd.f32 %v665, %v841
        %v843 = vpop.f32.mrf.mxu0
        %v844 = vadd.f32 %v665, %v843
        %845 = vdwg.mxu0
        %846 = vmatpush.bf16.msra.mxu0 %v780
        %847 = vmatpush.bf16.msra.mxu0 %v778
        %848 = vmatpush.bf16.msra.mxu0 %v776
        %849 = vmatpush.bf16.msra.mxu0 %v774
        %850 = vmatpush.bf16.msra.mxu0 %v772
        %851 = vmatpush.bf16.msra.mxu0 %v770
        %852 = vmatpush.bf16.msra.mxu0 %v768
        %853 = vmatpush.bf16.msra.mxu0 %v766
        %854 = vmatmul.bf16.gmra.mxu0 %v701
        %v855 = vpop.f32.mrf.mxu0
        %v856 = vadd.f32 %v666, %v855
        %v857 = vpop.f32.mrf.mxu0
        %v858 = vadd.f32 %v666, %v857
        %859 = vmatmul.bf16.gmra.mxu0 %v702
        %v860 = vpop.f32.mrf.mxu0
        %v861 = vadd.f32 %v666, %v860
        %v862 = vpop.f32.mrf.mxu0
        %v863 = vadd.f32 %v666, %v862
        %864 = vmatmul.bf16.gmra.mxu0 %v703
        %v865 = vpop.f32.mrf.mxu0
        %v866 = vadd.f32 %v666, %v865
        %v867 = vpop.f32.mrf.mxu0
        %v868 = vadd.f32 %v666, %v867
        %869 = vmatmul.bf16.gmra.mxu0 %v704
        %v870 = vpop.f32.mrf.mxu0
        %v871 = vadd.f32 %v666, %v870
        %v872 = vpop.f32.mrf.mxu0
        %v873 = vadd.f32 %v666, %v872
        %874 = vmatmul.bf16.gmra.mxu0 %v705
        %v875 = vpop.f32.mrf.mxu0
        %v876 = vadd.f32 %v666, %v875
        %v877 = vpop.f32.mrf.mxu0
        %v878 = vadd.f32 %v666, %v877
        %879 = vmatmul.bf16.gmra.mxu0 %v706
        %v880 = vpop.f32.mrf.mxu0
        %v881 = vadd.f32 %v666, %v880
        %v882 = vpop.f32.mrf.mxu0
        %v883 = vadd.f32 %v666, %v882
        %884 = vmatmul.bf16.gmra.mxu0 %v707
        %v885 = vpop.f32.mrf.mxu0
        %v886 = vadd.f32 %v666, %v885
        %v887 = vpop.f32.mrf.mxu0
        %v888 = vadd.f32 %v666, %v887
        %889 = vmatmul.bf16.gmra.mxu0 %v708
        %v890 = vpop.f32.mrf.mxu0
        %v891 = vadd.f32 %v666, %v890
        %v892 = vpop.f32.mrf.mxu0
        %v893 = vadd.f32 %v666, %v892
        %894 = vdwg.mxu0
        %v895 = vpack.c.bf16 %v608, %v608
        %v896 = vpack.c.bf16 %v610, %v610
        %v897 = vpack.c.bf16 %v613, %v613
        %v898 = vpack.c.bf16 %v615, %v615
        %v899 = vpack.c.bf16 %v618, %v618
        %v900 = vpack.c.bf16 %v620, %v620
        %v901 = vpack.c.bf16 %v623, %v623
        %v902 = vpack.c.bf16 %v625, %v625
        %v903 = vpack.c.bf16 %v628, %v628
        %v904 = vpack.c.bf16 %v630, %v630
        %v905 = vpack.c.bf16 %v633, %v633
        %v906 = vpack.c.bf16 %v635, %v635
        %v907 = vpack.c.bf16 %v638, %v638
        %v908 = vpack.c.bf16 %v640, %v640
        %v909 = vpack.c.bf16 %v643, %v643
        %v910 = vpack.c.bf16 %v645, %v645
        %911 = vst [vmem:[%s430] sm:$0xf] %v895
        %912 = vst [vmem:[%s430 + $0x4] sm:$0xf] %v896
        %913 = vst [vmem:[%s430 + $0x8] sm:$0xf] %v897
        %914 = vst [vmem:[%s430 + $0xc] sm:$0xf] %v898
        %915 = vst [vmem:[%s430 + $0x10] sm:$0xf] %v899
        %916 = vst [vmem:[%s430 + $0x14] sm:$0xf] %v900
        %917 = vst [vmem:[%s430 + $0x18] sm:$0xf] %v901
        %918 = vst [vmem:[%s430 + $0x1c] sm:$0xf] %v902
        %919 = vst [vmem:[%s430 + $0x20] sm:$0xf] %v903
        %920 = vst [vmem:[%s430 + $0x24] sm:$0xf] %v904
        %921 = vst [vmem:[%s430 + $0x28] sm:$0xf] %v905
        %922 = vst [vmem:[%s430 + $0x2c] sm:$0xf] %v906
        %923 = vst [vmem:[%s430 + $0x30] sm:$0xf] %v907
        %924 = vst [vmem:[%s430 + $0x34] sm:$0xf] %v908
        %925 = vst [vmem:[%s430 + $0x38] sm:$0xf] %v909
        %926 = vst [vmem:[%s430 + $0x3c] sm:$0xf] %v910
        %v927 = vpack.c.bf16 %v856, %v807
        %v928 = vpack.c.bf16 %v858, %v809
        %v929 = vpack.c.bf16 %v861, %v812
        %v930 = vpack.c.bf16 %v863, %v814
        %v931 = vpack.c.bf16 %v866, %v817
        %v932 = vpack.c.bf16 %v868, %v819
        %v933 = vpack.c.bf16 %v871, %v822
        %v934 = vpack.c.bf16 %v873, %v824
        %v935 = vpack.c.bf16 %v876, %v827
        %v936 = vpack.c.bf16 %v878, %v829
        %v937 = vpack.c.bf16 %v881, %v832
        %v938 = vpack.c.bf16 %v883, %v834
        %v939 = vpack.c.bf16 %v886, %v837
        %v940 = vpack.c.bf16 %v888, %v839
        %v941 = vpack.c.bf16 %v891, %v842
        %v942 = vpack.c.bf16 %v893, %v844
        %943 = vst [vmem:[%s437] sm:$0xf] %v927
        %944 = vst [vmem:[%s437 + $0x4] sm:$0xf] %v928
        %945 = vst [vmem:[%s437 + $0x8] sm:$0xf] %v929
        %946 = vst [vmem:[%s437 + $0xc] sm:$0xf] %v930
        %947 = vst [vmem:[%s437 + $0x10] sm:$0xf] %v931
        %948 = vst [vmem:[%s437 + $0x14] sm:$0xf] %v932
        %949 = vst [vmem:[%s437 + $0x18] sm:$0xf] %v933
        %950 = vst [vmem:[%s437 + $0x1c] sm:$0xf] %v934
        %951 = vst [vmem:[%s437 + $0x20] sm:$0xf] %v935
        %952 = vst [vmem:[%s437 + $0x24] sm:$0xf] %v936
        %953 = vst [vmem:[%s437 + $0x28] sm:$0xf] %v937
        %954 = vst [vmem:[%s437 + $0x2c] sm:$0xf] %v938
        %955 = vst [vmem:[%s437 + $0x30] sm:$0xf] %v939
        %956 = vst [vmem:[%s437 + $0x34] sm:$0xf] %v940
        %957 = vst [vmem:[%s437 + $0x38] sm:$0xf] %v941
        %958 = vst [vmem:[%s437 + $0x3c] sm:$0xf] %v942
        %v975 = vrot.slane %v927, 4
        %v976 = vrot.slane %v928, 4
        %v977 = vrot.slane %v929, 4
        %v978 = vrot.slane %v930, 4
        %v979 = vrot.slane %v931, 4
        %v980 = vrot.slane %v932, 4
        %v981 = vrot.slane %v933, 4
        %v982 = vrot.slane %v934, 4
        %v983 = vrot.slane %v935, 4
        %v984 = vrot.slane %v936, 4
        %v985 = vrot.slane %v937, 4
        %v986 = vrot.slane %v938, 4
        %v987 = vrot.slane %v939, 4
        %v988 = vrot.slane %v940, 4
        %v989 = vrot.slane %v941, 4
        %v990 = vrot.slane %v942, 4
        %1007 = vst [vmem:[%s444] sm:$0xf] %v975
        %1008 = vst [vmem:[%s444 + $0x4] sm:$0xf] %v976
        %1009 = vst [vmem:[%s444 + $0x8] sm:$0xf] %v977
        %1010 = vst [vmem:[%s444 + $0xc] sm:$0xf] %v978
        %1011 = vst [vmem:[%s444 + $0x10] sm:$0xf] %v979
        %1012 = vst [vmem:[%s444 + $0x14] sm:$0xf] %v980
        %1013 = vst [vmem:[%s444 + $0x18] sm:$0xf] %v981
        %1014 = vst [vmem:[%s444 + $0x1c] sm:$0xf] %v982
        %1015 = vst [vmem:[%s444 + $0x20] sm:$0xf] %v983
        %1016 = vst [vmem:[%s444 + $0x24] sm:$0xf] %v984
        %1017 = vst [vmem:[%s444 + $0x28] sm:$0xf] %v985
        %1018 = vst [vmem:[%s444 + $0x2c] sm:$0xf] %v986
        %1019 = vst [vmem:[%s444 + $0x30] sm:$0xf] %v987
        %1020 = vst [vmem:[%s444 + $0x34] sm:$0xf] %v988
        %1021 = vst [vmem:[%s444 + $0x38] sm:$0xf] %v989
        %1022 = vst [vmem:[%s444 + $0x3c] sm:$0xf] %v990
        %s1023 = sand.u32 %s195, 1
        %s1024 = scalar_lea.sflag [#allocation4], %s1023
        %s1025 = sand.u32 %s195, 1
        %s1026 = smul.addr %s1025, 64
        %s1027 = scalar_lea.vmem [#allocation10], %s1026
        %s1028 = sand.u32 %s33, 1
        %s1029 = scalar_lea.sflag [#allocation12], %s1028
        %s1030 = sand.u32 %s223, 1
        %s1031 = smul.addr %s1030, 64
        %s1032 = scalar_lea.vmem [#allocation11], %s1031
        %s1033 = sand.u32 %s33, 1
        %s1034 = scalar_lea.sflag [#allocation12], %s1033
        %s1035 = sand.u32 %s251, 1
        %s1036 = smul.addr %s1035, 64
        %s1037 = scalar_lea.vmem [#allocation13], %s1036
        // Predicated region
        $region61: #{tpu_custom_call.1} parent=43 // pred_check
          %p1038 = pneg %p205
        $region62: #{tpu_custom_call.1} parent=43 // pred_check_branch
          %1040 = sbr.rel (%p1038) target = $region64
        $region63: #{tpu_custom_call.1} parent=43 // pred_region
          %s1041 = smul.u32 16, %s38
          %1043 = vsyncadd %s1024, 0
          %s1044 = smul.addr %s37, 16
          %s1045 = sadd.s32 %s1041, %s1044
          %s1046 = smul.addr %s1045, 4
          %s1047 = scalar_lea.hbm %s6, %s1046
          %s1048 = sshll.u32 %s1027, 4
          %s1049 = int_to_ptr.vmem [resolvable:$true] %s1048
          %s1050 = sshll.u32 %s1047, 4
          %s1051 = int_to_ptr.hbm [resolvable:$true] %s1050
          %1056 = dma.vmem_to_hbm [thread:$0]  %s1049, 1024, %s1051, %s1024, 64, 64, 4
        $region64: #{tpu_custom_call.1} parent=43 // pred_fallthru
          _
        // Predicated region
        $region65: #{tpu_custom_call.1} parent=43 // pred_check
          %p1057 = pneg %p233
        $region66: #{tpu_custom_call.1} parent=43 // pred_check_branch
          %1059 = sbr.rel (%p1057) target = $region68
        $region67: #{tpu_custom_call.1} parent=43 // pred_region
          %s1060 = smul.u32 16, %s38
          %1062 = vsyncadd %s1029, 0
          %s1063 = smul.addr %s37, 16
          %s1064 = sadd.s32 %s1060, %s1063
          %s1065 = smul.addr %s1064, 4
          %s1066 = scalar_lea.hbm %s7, %s1065
          %s1067 = sshll.u32 %s1032, 4
          %s1068 = int_to_ptr.vmem [resolvable:$true] %s1067
          %s1069 = sshll.u32 %s1066, 4
          %s1070 = int_to_ptr.hbm [resolvable:$true] %s1069
          %1075 = dma.vmem_to_hbm [thread:$0]  %s1068, 1024, %s1070, %s1029, 64, 64, 4
        $region68: #{tpu_custom_call.1} parent=43 // pred_fallthru
          _
        // Predicated region
        $region69: #{tpu_custom_call.1} parent=43 // pred_check
          %p1076 = pneg %p261
        $region70: #{tpu_custom_call.1} parent=43 // pred_check_branch
          %1078 = sbr.rel (%p1076) target = $region72
        $region71: #{tpu_custom_call.1} parent=43 // pred_region
          %s1079 = smul.u32 16, %s38
          %1081 = vsyncadd %s1034, 0
          %s1082 = smul.addr %s37, 16
          %s1083 = sadd.s32 %s1079, %s1082
          %s1084 = smul.addr %s1083, 4
          %s1085 = scalar_lea.hbm %s8, %s1084
          %s1086 = sshll.u32 %s1037, 4
          %s1087 = int_to_ptr.vmem [resolvable:$true] %s1086
          %s1088 = sshll.u32 %s1085, 4
          %s1089 = int_to_ptr.hbm [resolvable:$true] %s1088
          %1094 = dma.vmem_to_hbm [thread:$0]  %s1087, 1024, %s1089, %s1034, 64, 64, 4
        $region72: #{tpu_custom_call.1} parent=43 // pred_fallthru
          _
      $region44: #{tpu_custom_call.1} parent=5 // pred_fallthru
        _
      %p1095 = scmp.le.s32.totalorder 2, %s28
      // Predicated region
      $region73: #{tpu_custom_call.1} parent=5 // pred_check
        %p1096 = pneg %p1095
      $region74: #{tpu_custom_call.1} parent=5 // pred_check_branch
        %1098 = sbr.rel (%p1096) target = $region76
      $region75: #{tpu_custom_call.1} parent=5 // pred_region
        %s1099 = ssub.s32 %s28, 2
        // Predicated region
        $region77: #{tpu_custom_call.1} parent=75 // pred_check
          %p1100 = pneg %p211
        $region78: #{tpu_custom_call.1} parent=75 // pred_check_branch
          %1102 = sbr.rel (%p1100) target = $region80
        $region79: #{tpu_custom_call.1} parent=75 // pred_region
          %s1103 = sand.u32 %s196, 1
          %s1104 = scalar_lea.sflag [#allocation4], %s1103
          %s1105 = sand.u32 %s196, 1
          %s1106 = smul.addr %s1105, 64
          %s1107 = scalar_lea.vmem [#allocation10], %s1106
          %1109 = dma.done %s1104, 1024
        $region80: #{tpu_custom_call.1} parent=75 // pred_fallthru
          _
        // Predicated region
        $region81: #{tpu_custom_call.1} parent=75 // pred_check
          %p1110 = pneg %p239
        $region82: #{tpu_custom_call.1} parent=75 // pred_check_branch
          %1112 = sbr.rel (%p1110) target = $region84
        $region83: #{tpu_custom_call.1} parent=75 // pred_region
          %s1113 = sand.u32 %s34, 1
          %s1114 = scalar_lea.sflag [#allocation12], %s1113
          %s1115 = sand.u32 %s224, 1
          %s1116 = smul.addr %s1115, 64
          %s1117 = scalar_lea.vmem [#allocation11], %s1116
          %1119 = dma.done %s1114, 1024
        $region84: #{tpu_custom_call.1} parent=75 // pred_fallthru
          _
        // Predicated region
        $region85: #{tpu_custom_call.1} parent=75 // pred_check
          %p1120 = pneg %p267
        $region86: #{tpu_custom_call.1} parent=75 // pred_check_branch
          %1122 = sbr.rel (%p1120) target = $region88
        $region87: #{tpu_custom_call.1} parent=75 // pred_region
          %s1123 = sand.u32 %s34, 1
          %s1124 = scalar_lea.sflag [#allocation12], %s1123
          %s1125 = sand.u32 %s252, 1
          %s1126 = smul.addr %s1125, 64
          %s1127 = scalar_lea.vmem [#allocation13], %s1126
          %1129 = dma.done %s1124, 1024
        $region88: #{tpu_custom_call.1} parent=75 // pred_fallthru
          _
      $region76: #{tpu_custom_call.1} parent=5 // pred_fallthru
        _
    $region6: #{tpu_custom_call.1} parent=1 // loop_footer
      %s32 = sadd.s32 1, %s28
    $region7: #{tpu_custom_call.1} parent=1 // loop_footer_branch
      %27 = sbr.rel target = $region3
    $region8: #{tpu_custom_call.1} parent=1 // loop_exit
      _
    %1130 = vsyncpa [#allocation3], 1
    %s1131 = scalar_lea.sflag [#allocation3], 1
    %1132 = vsyncpa %s1131, 1
    %1133 = vsyncpa [#allocation6], 1
    %s1134 = scalar_lea.sflag [#allocation6], 1
    %1135 = vsyncpa %s1134, 1
    %1136 = vsyncpa [#allocation9], 1
    %1137 = vsyncpa [#allocation4], 1
    %s1138 = scalar_lea.sflag [#allocation4], 1
    %1139 = vsyncpa %s1138, 1
    %1140 = vsyncpa [#allocation12], 1
    %s1141 = scalar_lea.sflag [#allocation12], 1
    %1142 = vsyncpa %s1141, 1

</llo_original>
